<compile_context>
chip_gen: v5e
topology: v5e:2x2
jax: 0.10.0
libtpu: 0.0.40
codegen_flags: <defaults>
</compile_context>

<pallas_src>
import jax
import jax.numpy as jnp
from jax.experimental import pallas as pl
from jax.experimental.pallas import tpu as pltpu


_VMEM_BUDGET = 48 << 20  # stay well under v7x's 64 MiB physical VMEM per TC


def _round_up(x, m):
    return (x + m - 1) // m * m


def _pad2d(a, rows, cols):
    pr, pc = rows - a.shape[0], cols - a.shape[1]
    if pr == 0 and pc == 0:
        return a
    return jnp.pad(a, ((0, pr), (0, pc)))


# ----------------------------- kernels --------------------------------------


def _chain_matmul_kernel(x1_ref, gamma_ref, x2_ref, out_ref):
    # x1_ref: (tm, Kp), gamma_ref: (Kp, Np), x2_ref: (Np, Pp), out_ref: (tm, Pp)
    # Intermediate (tm, Np) stays in vregs -- no VMEM scratch.
    x1g = jnp.dot(x1_ref[...], gamma_ref[...],
                  preferred_element_type=jnp.float32)          # MXU
    out = jnp.dot(x1g, x2_ref[...],
                  preferred_element_type=jnp.float32)          # MXU
    out_ref[...] = out.astype(out_ref.dtype)


def _matmul_kernel(a_ref, b_ref, out_ref):
    out_ref[...] = jnp.dot(a_ref[...], b_ref[...],
                           preferred_element_type=jnp.float32).astype(out_ref.dtype)


# ----------------------------- wrappers --------------------------------------


def _fused_chain_matmul(x1, gamma, x2, *, tm_max=512):
    """out = (x1 @ gamma) @ x2, fused in one kernel, tiled over rows of x1."""
    M, K = x1.shape
    _, N = gamma.shape
    _, P = x2.shape
    Kp, Np, Pp = _round_up(K, 128), _round_up(N, 128), _round_up(P, 128)

    # Row-tile size: biggest (<= tm_max) whose double-buffered blocks fit VMEM.
    resident = (Kp * Np + Np * Pp) * 4          # gamma + x2 blocks
    per_row = (Kp + Pp) * 4                     # x1 row + out row
    tm = min(tm_max, _round_up(M, 8))
    while tm > 8 and 2 * (tm * per_row + resident) > _VMEM_BUDGET:
        tm //= 2
    tm = max(tm, 8)
    Mp = _round_up(M, tm)

    x1p = _pad2d(x1, Mp, Kp)
    gp = _pad2d(gamma, Kp, Np)
    x2p = _pad2d(x2, Np, Pp)

    vmem_need = 2 * (tm * Kp + Kp * Np + Np * Pp + tm * Pp) * 4
    vmem_limit = int(min(max(vmem_need + (8 << 20), 32 << 20), 64 << 20))

    out = pl.pallas_call(
        _chain_matmul_kernel,
        out_shape=jax.ShapeDtypeStruct((Mp, Pp), jnp.float32),
        grid_spec=pltpu.PrefetchScalarGridSpec(
            num_scalar_prefetch=0,
            grid=(Mp // tm,),
            in_specs=[
                pl.BlockSpec((tm, Kp), lambda i: (i, 0)),
                pl.BlockSpec((Kp, Np), lambda i: (0, 0)),   # resident
                pl.BlockSpec((Np, Pp), lambda i: (0, 0)),   # resident
            ],
            out_specs=pl.BlockSpec((tm, Pp), lambda i: (i, 0)),
        ),
        compiler_params=pltpu.CompilerParams(
            dimension_semantics=("parallel",),   # shards M-tiles across v7x's 2 TCs
            vmem_limit_bytes=vmem_limit,
        ),
    )(x1p, gp, x2p)
    return out[:M, :P]


def _row_tiled_matmul(a, b, *, tm_max=512):
    """Plain a @ b, tiled over rows of `a`, b resident in VMEM."""
    M, K = a.shape
    _, N = b.shape
    Kp, Np = _round_up(K, 128), _round_up(N, 128)

    resident = Kp * Np * 4
    per_row = (Kp + Np) * 4
    tm = min(tm_max, _round_up(M, 8))
    while tm > 8 and 2 * (tm * per_row + resident) > _VMEM_BUDGET:
        tm //= 2
    tm = max(tm, 8)
    Mp = _round_up(M, tm)

    ap = _pad2d(a, Mp, Kp)
    bp = _pad2d(b, Kp, Np)

    vmem_need = 2 * (tm * Kp + Kp * Np + tm * Np) * 4
    vmem_limit = int(min(max(vmem_need + (8 << 20), 32 << 20), 64 << 20))

    out = pl.pallas_call(
        _matmul_kernel,
        out_shape=jax.ShapeDtypeStruct((Mp, Np), jnp.float32),
        grid_spec=pltpu.PrefetchScalarGridSpec(
            num_scalar_prefetch=0,
            grid=(Mp // tm,),
            in_specs=[
                pl.BlockSpec((tm, Kp), lambda i: (i, 0)),
                pl.BlockSpec((Kp, Np), lambda i: (0, 0)),   # resident
            ],
            out_specs=pl.BlockSpec((tm, Np), lambda i: (i, 0)),
        ),
        compiler_params=pltpu.CompilerParams(
            dimension_semantics=("parallel",),
            vmem_limit_bytes=vmem_limit,
        ),
    )(ap, bp)
    return out[:M, :N]


def gan_align(x1, x2, gamma):
    """Pallas-TPU equivalent of GAN_align.forward(x1, x2, gamma)."""
    x1_2d = jnp.squeeze(x1, axis=-1)   # (M, K)  -- glue
    x2_2d = jnp.squeeze(x2, axis=0)    # (N, P)  -- glue

    M, K = x1_2d.shape
    Kg, N = gamma.shape
    Nx, P = x2_2d.shape
    assert K == Kg and N == Nx

    # Shape-dependent association (documented choice):
    #   left  : (x1 @ gamma) @ x2  -> 2*M*N*(K+P) FLOPs  (best when M is small)
    #   right : x1 @ (gamma @ x2)  -> 2*K*P*(M+N) FLOPs  (best when M is large)
    if M * N * (K + P) <= K * P * (M + N):
        return _fused_chain_matmul(x1_2d, gamma, x2_2d)
    gx2 = _row_tiled_matmul(gamma, x2_2d)    # (K, P), computed once
    return _row_tiled_matmul(x1_2d, gx2)     # (M, P)


if __name__ == "__main__":
    # Small shapes consistent with the forward's matmul chain.
    M, K, N, P = 8, 32, 32, 16

    key = jax.random.PRNGKey(0)
    k1, k2, k3 = jax.random.split(key, 3)
    x1 = jax.random.normal(k1, (M, K, 1), dtype=jnp.float32)   # squeezed on -1
    x2 = jax.random.normal(k2, (1, N, P), dtype=jnp.float32)   # squeezed on 0
    gamma = jax.random.normal(k3, (K, N), dtype=jnp.float32)

    out = jax.block_until_ready(gan_align(x1, x2, gamma))

    # Reference check in plain JAX.
    ref = (jnp.squeeze(x1, -1) @ gamma) @ jnp.squeeze(x2, 0)
    assert out.shape == (M, P)
    assert jnp.allclose(out, ref, atol=1e-4, rtol=1e-4)

    print("KERNEL_OK")
</pallas_src>

<mosaic_0001>
module attributes {stable_mosaic.version = 11 : i64} {
  func.func @_chain_matmul_kernel(%arg0: i32, %arg1: memref<8x128xf32, #tpu.memory_space<vmem>>, %arg2: memref<128x128xf32, #tpu.memory_space<vmem>>, %arg3: memref<128x128xf32, #tpu.memory_space<vmem>>, %arg4: memref<8x128xf32, #tpu.memory_space<vmem>>) attributes {dimension_semantics = [#tpu.dimension_semantics<parallel>], iteration_bounds = array<i64: 1>, scalar_prefetch = 0 : i64, scratch_operands = 0 : i64, tpu.core_type = #tpu.core_type<tc>, window_params = [{transform_indices = @transform_0, window_bounds = array<i64: 8, 128>}, {pipeline_mode = #tpu.pipeline_mode<synchronous>, transform_indices = @transform_1, window_bounds = array<i64: 128, 128>}, {pipeline_mode = #tpu.pipeline_mode<synchronous>, transform_indices = @transform_2, window_bounds = array<i64: 128, 128>}, {transform_indices = @transform_3, window_bounds = array<i64: 8, 128>}]} {
    %c0 = arith.constant 0 : index
    %c0_0 = arith.constant 0 : index
    %0 = vector.load %arg1[%c0, %c0_0] : memref<8x128xf32, #tpu.memory_space<vmem>>, vector<8x128xf32>
    %c0_1 = arith.constant 0 : index
    %c0_2 = arith.constant 0 : index
    %1 = vector.load %arg2[%c0_1, %c0_2] : memref<128x128xf32, #tpu.memory_space<vmem>>, vector<128x128xf32>
    %cst = arith.constant dense<0.000000e+00> : vector<8x128xf32>
    %2 = tpu.matmul %0, %1, %cst {dimension_numbers = #tpu.dot_dimension_numbers<[1], [0], [0], [1], [0, 0, 1, 1], [], []>} : vector<8x128xf32>, vector<128x128xf32>, vector<8x128xf32> -> vector<8x128xf32>
    %c0_3 = arith.constant 0 : index
    %c0_4 = arith.constant 0 : index
    %3 = vector.load %arg3[%c0_3, %c0_4] : memref<128x128xf32, #tpu.memory_space<vmem>>, vector<128x128xf32>
    %cst_5 = arith.constant dense<0.000000e+00> : vector<8x128xf32>
    %4 = tpu.matmul %2, %3, %cst_5 {dimension_numbers = #tpu.dot_dimension_numbers<[1], [0], [0], [1], [0, 0, 1, 1], [], []>} : vector<8x128xf32>, vector<128x128xf32>, vector<8x128xf32> -> vector<8x128xf32>
    %c0_6 = arith.constant 0 : index
    %c0_7 = arith.constant 0 : index
    %5 = vector.load %arg4[%c0_6, %c0_7] : memref<8x128xf32, #tpu.memory_space<vmem>>, vector<8x128xf32>
    tpu.vector_store %arg4[%c0_6, %c0_7], %4 {strides = array<i32>} : memref<8x128xf32, #tpu.memory_space<vmem>>, vector<8x128xf32>,
    return
  }
  func.func @transform_0(%arg0: i32) -> (i32, i32) {
    %c0_i32 = arith.constant 0 : i32
    %c0_i32_0 = arith.constant 0 : i32
    return %arg0, %c0_i32 : i32, i32
  }
  func.func @transform_1(%arg0: i32) -> (i32, i32) {
    %c0_i32 = arith.constant 0 : i32
    %c0_i32_0 = arith.constant 0 : i32
    %c0_i32_1 = arith.constant 0 : i32
    return %c0_i32, %c0_i32_0 : i32, i32
  }
  func.func @transform_2(%arg0: i32) -> (i32, i32) {
    %c0_i32 = arith.constant 0 : i32
    %c0_i32_0 = arith.constant 0 : i32
    %c0_i32_1 = arith.constant 0 : i32
    return %c0_i32, %c0_i32_0 : i32, i32
  }
  func.func @transform_3(%arg0: i32) -> (i32, i32) {
    %c0_i32 = arith.constant 0 : i32
    %c0_i32_0 = arith.constant 0 : i32
    return %arg0, %c0_i32 : i32, i32
  }
}

</mosaic_0001>

<llo_original>
// kernel: tpu_custom_call.1
$region0: #{tpu_custom_call.1}
  #allocation0 [shape = 'u32[]', space=smem, size = 0x4, offset = 0x4, fixed_abs, tag = 'smem constant byte address 0x4 - core index']
  #allocation1 [shape = 'u32[72,128]{1,0:T(1,128)}', space=vmem, size = 0x9000, scoped, tag = 'internal scratch']
  %s0 = inlined_call_operand.hbm [shape: f32[8,128], index: 0, kind: input, shape index: {}]
  %s1 = inlined_call_operand.hbm [shape: f32[128,128], index: 1, kind: input, shape index: {}]
  %s2 = inlined_call_operand.hbm [shape: f32[128,128], index: 2, kind: input, shape index: {}]
  %s3 = inlined_call_operand.hbm [shape: f32[8,128], index: 3, kind: output, shape index: {}]
  %s4 = sld [smem:[#allocation0]]
  $region34: #{tpu_custom_call.1} parent=0
    _
  %s6 = ssub.s32 1, %s4
  %s7 = scalar_select 0, %s6, %s4
  $region1: #{tpu_custom_call.1} parent=0
    #allocation2 [shape = 'u8[4096]{0}', space=vmem, size = 0x1000, scoped, tag = 'input window, operand 0, single buffered']
    #allocation3 [shape = 's32[1]{0}', space=sflag, size = 0x4, scoped, tag = 'scoped memory for tpu_custom_call.1']
    #allocation4 [shape = 's32[1]{0}', space=sflag, size = 0x4, scoped, tag = 'scoped memory for tpu_custom_call.1']
    #allocation5 [shape = 'u8[65536]{0}', space=vmem, size = 0x10000, scoped, tag = 'input window, operand 1, single buffered']
    #allocation6 [shape = 's32[1]{0}', space=sflag, size = 0x4, scoped, tag = 'scoped memory for tpu_custom_call.1']
    #allocation7 [shape = 'u8[65536]{0}', space=vmem, size = 0x10000, scoped, tag = 'input window, operand 2, single buffered']
    #allocation8 [shape = 'u8[4096]{0}', space=vmem, size = 0x1000, scoped, tag = 'output window, operand 0, single buffered']
    %8 = vsyncpa [#allocation3], 0
    %9 = vsyncpa [#allocation6], 0
    %10 = vsyncpa [#allocation4], 0
    // Predicated region
    $region2: #{tpu_custom_call.1} parent=1 // pred_check
      _
    $region3: #{tpu_custom_call.1} parent=1 // pred_check_branch
      %12 = sbr.rel (0) target = $region5
    $region4: #{tpu_custom_call.1} parent=1 // pred_region
      %14 = vsyncadd [#allocation3], 0
      %s16 = sshll.u32 %s0, 4
      %s17 = int_to_ptr.hbm [resolvable:$true] %s16
      %s18 = sshll.u32 [#allocation2], 4
      %s19 = int_to_ptr.vmem [resolvable:$true] %s18
      %21 = dma.hbm_to_vmem [thread:$0]  %s17, 128, %s19, [#allocation3]
    $region5: #{tpu_custom_call.1} parent=1 // pred_fallthru
      _
    // Predicated region
    $region6: #{tpu_custom_call.1} parent=1 // pred_check
      _
    $region7: #{tpu_custom_call.1} parent=1 // pred_check_branch
      %23 = sbr.rel (0) target = $region9
    $region8: #{tpu_custom_call.1} parent=1 // pred_region
      %25 = vsyncadd [#allocation6], 0
      %s26 = sshll.u32 %s1, 4
      %s27 = int_to_ptr.hbm [resolvable:$true] %s26
      %s28 = sshll.u32 [#allocation5], 4
      %s29 = int_to_ptr.vmem [resolvable:$true] %s28
      %34 = dma.hbm_to_vmem [thread:$0]  %s27, 2048, %s29, [#allocation6], 128, 128, 8
    $region9: #{tpu_custom_call.1} parent=1 // pred_fallthru
      _
    // Predicated region
    $region10: #{tpu_custom_call.1} parent=1 // pred_check
      _
    $region11: #{tpu_custom_call.1} parent=1 // pred_check_branch
      %36 = sbr.rel (0) target = $region13
    $region12: #{tpu_custom_call.1} parent=1 // pred_region
      %38 = vsyncadd [#allocation6], 0
      %s39 = sshll.u32 %s2, 4
      %s40 = int_to_ptr.hbm [resolvable:$true] %s39
      %s41 = sshll.u32 [#allocation7], 4
      %s42 = int_to_ptr.vmem [resolvable:$true] %s41
      %47 = dma.hbm_to_vmem [thread:$0]  %s40, 2048, %s42, [#allocation6], 128, 128, 8
    $region13: #{tpu_custom_call.1} parent=1 // pred_fallthru
      _
    // Predicated region
    $region14: #{tpu_custom_call.1} parent=1 // pred_check
      _
    $region15: #{tpu_custom_call.1} parent=1 // pred_check_branch
      %49 = sbr.rel (0) target = $region17
    $region16: #{tpu_custom_call.1} parent=1 // pred_region
      %51 = dma.done [#allocation3], 128
    $region17: #{tpu_custom_call.1} parent=1 // pred_fallthru
      _
    // Predicated region
    $region18: #{tpu_custom_call.1} parent=1 // pred_check
      _
    $region19: #{tpu_custom_call.1} parent=1 // pred_check_branch
      %53 = sbr.rel (0) target = $region21
    $region20: #{tpu_custom_call.1} parent=1 // pred_region
      %55 = dma.done [#allocation6], 2048
    $region21: #{tpu_custom_call.1} parent=1 // pred_fallthru
      _
    // Predicated region
    $region22: #{tpu_custom_call.1} parent=1 // pred_check
      _
    $region23: #{tpu_custom_call.1} parent=1 // pred_check_branch
      %57 = sbr.rel (0) target = $region25
    $region24: #{tpu_custom_call.1} parent=1 // pred_region
      %59 = dma.done [#allocation6], 2048
    $region25: #{tpu_custom_call.1} parent=1 // pred_fallthru
      _
    %v60 = vld [vmem:[#allocation2] sm:$0xff]
    %v61 = vld [vmem:[#allocation5] sm:$0xff]
    %v62 = vld [vmem:[#allocation5 + $0x8] sm:$0xff]
    %v63 = vld [vmem:[#allocation5 + $0x10] sm:$0xff]
    %v64 = vld [vmem:[#allocation5 + $0x18] sm:$0xff]
    %v65 = vld [vmem:[#allocation5 + $0x20] sm:$0xff]
    %v66 = vld [vmem:[#allocation5 + $0x28] sm:$0xff]
    %v67 = vld [vmem:[#allocation5 + $0x30] sm:$0xff]
    %v68 = vld [vmem:[#allocation5 + $0x38] sm:$0xff]
    %v69 = vld [vmem:[#allocation5 + $0x40] sm:$0xff]
    %v70 = vld [vmem:[#allocation5 + $0x48] sm:$0xff]
    %v71 = vld [vmem:[#allocation5 + $0x50] sm:$0xff]
    %v72 = vld [vmem:[#allocation5 + $0x58] sm:$0xff]
    %v73 = vld [vmem:[#allocation5 + $0x60] sm:$0xff]
    %v74 = vld [vmem:[#allocation5 + $0x68] sm:$0xff]
    %v75 = vld [vmem:[#allocation5 + $0x70] sm:$0xff]
    %v76 = vld [vmem:[#allocation5 + $0x78] sm:$0xff]
    %77 = vmatpush.msra.mxu0 %v76
    %78 = vmatpush.msra.mxu0 %v75
    %79 = vmatpush.msra.mxu0 %v74
    %80 = vmatpush.msra.mxu0 %v73
    %81 = vmatpush.msra.mxu0 %v72
    %82 = vmatpush.msra.mxu0 %v71
    %83 = vmatpush.msra.mxu0 %v70
    %84 = vmatpush.msra.mxu0 %v69
    %85 = vmatpush.msra.mxu0 %v68
    %86 = vmatpush.msra.mxu0 %v67
    %87 = vmatpush.msra.mxu0 %v66
    %88 = vmatpush.msra.mxu0 %v65
    %89 = vmatpush.msra.mxu0 %v64
    %90 = vmatpush.msra.mxu0 %v63
    %91 = vmatpush.msra.mxu0 %v62
    %92 = vmatpush.msra.mxu0 %v61
    %93 = vmatmul.f32.gmra.mxu0 %v60
    %v94 = vpop.f32.mrf.mxu0
    %v95 = vadd.f32 0.0, %v94
    %96 = vdwg.mxu0
    %v97 = vld [vmem:[#allocation7] sm:$0xff]
    %v98 = vld [vmem:[#allocation7 + $0x8] sm:$0xff]
    %v99 = vld [vmem:[#allocation7 + $0x10] sm:$0xff]
    %v100 = vld [vmem:[#allocation7 + $0x18] sm:$0xff]
    %v101 = vld [vmem:[#allocation7 + $0x20] sm:$0xff]
    %v102 = vld [vmem:[#allocation7 + $0x28] sm:$0xff]
    %v103 = vld [vmem:[#allocation7 + $0x30] sm:$0xff]
    %v104 = vld [vmem:[#allocation7 + $0x38] sm:$0xff]
    %v105 = vld [vmem:[#allocation7 + $0x40] sm:$0xff]
    %v106 = vld [vmem:[#allocation7 + $0x48] sm:$0xff]
    %v107 = vld [vmem:[#allocation7 + $0x50] sm:$0xff]
    %v108 = vld [vmem:[#allocation7 + $0x58] sm:$0xff]
    %v109 = vld [vmem:[#allocation7 + $0x60] sm:$0xff]
    %v110 = vld [vmem:[#allocation7 + $0x68] sm:$0xff]
    %v111 = vld [vmem:[#allocation7 + $0x70] sm:$0xff]
    %v112 = vld [vmem:[#allocation7 + $0x78] sm:$0xff]
    %113 = vmatpush.msra.mxu0 %v112
    %114 = vmatpush.msra.mxu0 %v111
    %115 = vmatpush.msra.mxu0 %v110
    %116 = vmatpush.msra.mxu0 %v109
    %117 = vmatpush.msra.mxu0 %v108
    %118 = vmatpush.msra.mxu0 %v107
    %119 = vmatpush.msra.mxu0 %v106
    %120 = vmatpush.msra.mxu0 %v105
    %121 = vmatpush.msra.mxu0 %v104
    %122 = vmatpush.msra.mxu0 %v103
    %123 = vmatpush.msra.mxu0 %v102
    %124 = vmatpush.msra.mxu0 %v101
    %125 = vmatpush.msra.mxu0 %v100
    %126 = vmatpush.msra.mxu0 %v99
    %127 = vmatpush.msra.mxu0 %v98
    %128 = vmatpush.msra.mxu0 %v97
    %129 = vmatmul.f32.gmra.mxu0 %v95
    %v130 = vpop.f32.mrf.mxu0
    %v131 = vadd.f32 0.0, %v130
    %132 = vdwg.mxu0
    %133 = vst [vmem:[#allocation8] sm:$0xff] %v131
    // Predicated region
    $region26: #{tpu_custom_call.1} parent=1 // pred_check
      _
    $region27: #{tpu_custom_call.1} parent=1 // pred_check_branch
      %135 = sbr.rel (0) target = $region29
    $region28: #{tpu_custom_call.1} parent=1 // pred_region
      %137 = vsyncadd [#allocation4], 0
      %s139 = sshll.u32 [#allocation8], 4
      %s140 = int_to_ptr.vmem [resolvable:$true] %s139
      %s141 = sshll.u32 %s3, 4
      %s142 = int_to_ptr.hbm [resolvable:$true] %s141
      %144 = dma.vmem_to_hbm [thread:$0]  %s140, 128, %s142, [#allocation4]
    $region29: #{tpu_custom_call.1} parent=1 // pred_fallthru
      _
    // Predicated region
    $region30: #{tpu_custom_call.1} parent=1 // pred_check
      _
    $region31: #{tpu_custom_call.1} parent=1 // pred_check_branch
      %146 = sbr.rel (0) target = $region33
    $region32: #{tpu_custom_call.1} parent=1 // pred_region
      %148 = dma.done [#allocation4], 128
    $region33: #{tpu_custom_call.1} parent=1 // pred_fallthru
      _
    %149 = vsyncpa [#allocation3], 1
    %150 = vsyncpa [#allocation6], 1
    %151 = vsyncpa [#allocation4], 1

</llo_original>
